<compile_context>
chip_gen: v7x
topology: tpu7x:2x2x1
jax: 0.10.0
libtpu: 0.0.40
codegen_flags: <defaults>
</compile_context>

<pallas_src>
import jax
import jax.numpy as jnp
from jax import lax
from jax.experimental import pallas as pl
from jax.experimental.pallas import tpu as pltpu


def lstm_decoder_kernel(h_ref, w_ref, b_ref, out_ref):
    """Full LSTM rollout in one kernel invocation.

    h_ref  : (N, H)      initial hidden state
    w_ref  : (H, 4H)     fused recurrent weights, gate order (i, f, g, o) on lanes
    b_ref  : (1, 4H)     combined biases (bias_ih + bias_hh), fused gate layout
    out_ref: (T, N, H)   per-timestep hidden states (time-major)
    """
    T = out_ref.shape[0]
    N, H = h_ref.shape

    # Hoisted loop-invariants: weight, broadcast bias, g-gate lane mask.
    h = h_ref[...].astype(jnp.float32)
    c = jnp.zeros_like(h)
    w = w_ref[...].astype(jnp.float32)                                  # (H, 4H)
    b = jnp.broadcast_to(b_ref[...], (N, 4 * H)).astype(jnp.float32)    # (N, 4H)
    lane = lax.broadcasted_iota(jnp.int32, (N, 4 * H), 1)
    g_mask = (lane >= 2 * H) & (lane < 3 * H)                           # tanh lanes

    # Static Python unroll (T=8): every out_ref[t] store has a static offset
    # and the LLO scheduler sees across steps.
    for t in range(T):
        # One lane-dense MXU matmul per step: (N,H) @ (H,4H) -> (N,4H).
        gates = jnp.dot(h, w, preferred_element_type=jnp.float32) + b
        # Single EUP pass over the fused tile via tanh(x) = 2*sigmoid(2x) - 1:
        # pre-scale g lanes by 2, one sigmoid, then fix up g lanes on the VPU.
        pre = jnp.where(g_mask, 2.0 * gates, gates)
        s = jax.nn.sigmoid(pre)
        acts = jnp.where(g_mask, 2.0 * s - 1.0, s)                      # (N, 4H)
        i_g = acts[:, 0 * H:1 * H]
        f_g = acts[:, 1 * H:2 * H]
        g_g = acts[:, 2 * H:3 * H]
        o_g = acts[:, 3 * H:4 * H]
        c = f_g * c + i_g * g_g
        h = o_g * jnp.tanh(c)
        out_ref[t] = h.astype(out_ref.dtype)


def lstm_decoder(h_in, w_fused, b_fused, length, *, time_major=False):
    """Pallas wrapper.

    h_in   : (N, H)
    w_fused: (H, 4H)  == weight_hh.T   (PyTorch gate order i, f, g, o)
    b_fused: (1, 4H)  == (bias_ih + bias_hh)[None, :]
    Returns (N, H, length) matching torch.stack(out, axis=-1), or the
    time-major (length, N, H) buffer if time_major=True (skips the extra
    standalone transpose dispatch).
    """
    N, H = h_in.shape
    out_tnh = pl.pallas_call(
        lstm_decoder_kernel,
        out_shape=jax.ShapeDtypeStruct((length, N, H), h_in.dtype),
        grid=(1,),
        in_specs=[
            pl.BlockSpec((N, H), lambda i: (0, 0)),
            pl.BlockSpec((H, 4 * H), lambda i: (0, 0)),
            pl.BlockSpec((1, 4 * H), lambda i: (0, 0)),
        ],
        out_specs=pl.BlockSpec((length, N, H), lambda i: (0, 0, 0)),
        compiler_params=pltpu.CompilerParams(
            dimension_semantics=("arbitrary",)
        ),
    )(h_in, w_fused, b_fused)
    if time_major:
        return out_tnh
    # Layout glue only to match the PyTorch module's (N, H, T) output contract.
    return jnp.transpose(out_tnh, (1, 2, 0))


def lstm_decoder_ref(h_in, weight_hh, bias_ih, bias_hh, length):
    """Pure-JAX reference mirroring nn.LSTMCell(0, H) forward exactly."""
    N, H = h_in.shape
    h = h_in
    c = jnp.zeros_like(h)
    outs = []
    for _ in range(length):
        gates = h @ weight_hh.T + bias_ih + bias_hh      # (N, 4H), order i,f,g,o
        i = jax.nn.sigmoid(gates[:, 0 * H:1 * H])
        f = jax.nn.sigmoid(gates[:, 1 * H:2 * H])
        g = jnp.tanh(gates[:, 2 * H:3 * H])
        o = jax.nn.sigmoid(gates[:, 3 * H:4 * H])
        c = f * c + i * g
        h = o * jnp.tanh(c)
        outs.append(h)
    return jnp.stack(outs, axis=-1)                      # (N, H, T)


if __name__ == "__main__":
    N = 4          # batch
    H = 32         # encoded_size (hidden)
    LENGTH = 8     # decode length

    key = jax.random.PRNGKey(0)
    k_h, k_w, k_bi, k_bh = jax.random.split(key, 4)

    # Synthetic params mimicking nn.LSTMCell(0, H) init:
    # weight_hh: (4H, H) ~ U(-1/sqrt(H), 1/sqrt(H)); weight_ih is (4H, 0) -> omitted.
    bound = 1.0 / jnp.sqrt(jnp.float32(H))
    weight_hh = jax.random.uniform(k_w, (4 * H, H), jnp.float32, -bound, bound)
    bias_ih = jax.random.uniform(k_bi, (4 * H,), jnp.float32, -bound, bound)
    bias_hh = jax.random.uniform(k_bh, (4 * H,), jnp.float32, -bound, bound)

    # Repack for the fused kernel layout: W (H, 4H) and b (1, 4H).
    w_fused = jnp.transpose(weight_hh)                   # (H, 4H)
    b_fused = (bias_ih + bias_hh).reshape(1, 4 * H)      # (1, 4H)

    h_in = jax.random.normal(k_h, (N, H), jnp.float32)

    out = lstm_decoder(h_in, w_fused, b_fused, LENGTH)
    out = jax.block_until_ready(out)

    ref = lstm_decoder_ref(h_in, weight_hh, bias_ih, bias_hh, LENGTH)
    assert out.shape == (N, H, LENGTH), out.shape
    # Slightly relaxed rtol: the single-EUP-pass tanh(x) = 2*sigmoid(2x) - 1
    # identity differs from jnp.tanh at the ULP level.
    assert jnp.allclose(out, ref, rtol=1e-4, atol=1e-5), "mismatch vs reference"

    print("KERNEL_OK")
</pallas_src>

<mosaic_0001>
module attributes {stable_mosaic.version = 11 : i64} {
  func.func @lstm_decoder_kernel(%arg0: i32, %arg1: memref<4x32xf32, #tpu.memory_space<vmem>>, %arg2: memref<32x128xf32, #tpu.memory_space<vmem>>, %arg3: memref<1x128xf32, #tpu.memory_space<vmem>>, %arg4: memref<8x4x32xf32, #tpu.memory_space<vmem>>) attributes {dimension_semantics = [#tpu.dimension_semantics<arbitrary>], iteration_bounds = array<i64: 1>, scalar_prefetch = 0 : i64, scratch_operands = 0 : i64, tpu.core_type = #tpu.core_type<tc>, window_params = [{pipeline_mode = #tpu.pipeline_mode<synchronous>, transform_indices = @transform_0, window_bounds = array<i64: 4, 32>}, {pipeline_mode = #tpu.pipeline_mode<synchronous>, transform_indices = @transform_1, window_bounds = array<i64: 32, 128>}, {pipeline_mode = #tpu.pipeline_mode<synchronous>, transform_indices = @transform_2, window_bounds = array<i64: 1, 128>}, {pipeline_mode = #tpu.pipeline_mode<synchronous>, transform_indices = @transform_3, window_bounds = array<i64: 8, 4, 32>}]} {
    %c0 = arith.constant 0 : index
    %c0_0 = arith.constant 0 : index
    %0 = vector.load %arg1[%c0, %c0_0] : memref<4x32xf32, #tpu.memory_space<vmem>>, vector<4x32xf32>
    %cst = arith.constant 0.000000e+00 : f32
    %1 = vector.broadcast %cst : f32 to vector<4x32xf32>
    %c0_1 = arith.constant 0 : index
    %c0_2 = arith.constant 0 : index
    %2 = vector.load %arg2[%c0_1, %c0_2] : memref<32x128xf32, #tpu.memory_space<vmem>>, vector<32x128xf32>
    %c0_3 = arith.constant 0 : index
    %c0_4 = arith.constant 0 : index
    %3 = vector.load %arg3[%c0_3, %c0_4] : memref<1x128xf32, #tpu.memory_space<vmem>>, vector<1x128xf32>
    %4 = vector.shape_cast %3 : vector<1x128xf32> to vector<1x128xf32>
    %5 = vector.broadcast %4 : vector<1x128xf32> to vector<4x128xf32>
    %6 = tpu.iota {dimensions = array<i32: 1>} : vector<4x128xi32>
    %c64_i32 = arith.constant 64 : i32
    %7 = vector.broadcast %c64_i32 : i32 to vector<4x128xi32>
    %8 = arith.cmpi sge, %6, %7 : vector<4x128xi32>
    %c96_i32 = arith.constant 96 : i32
    %9 = vector.broadcast %c96_i32 : i32 to vector<4x128xi32>
    %10 = arith.cmpi slt, %6, %9 : vector<4x128xi32>
    %11 = arith.andi %8, %10 : vector<4x128xi1>
    %cst_5 = arith.constant dense<0.000000e+00> : vector<4x128xf32>
    %12 = tpu.matmul %0, %2, %cst_5 {dimension_numbers = #tpu.dot_dimension_numbers<[1], [0], [0], [1], [0, 0, 1, 1], [], []>} : vector<4x32xf32>, vector<32x128xf32>, vector<4x128xf32> -> vector<4x128xf32>
    %13 = arith.addf %12, %5 : vector<4x128xf32>
    %cst_6 = arith.constant 2.000000e+00 : f32
    %14 = vector.broadcast %cst_6 : f32 to vector<4x128xf32>
    %15 = arith.mulf %14, %13 : vector<4x128xf32>
    %16 = arith.select %11, %15, %13 : vector<4x128xi1>, vector<4x128xf32>
    %17 = arith.negf %16 : vector<4x128xf32>
    %18 = math.exp %17 : vector<4x128xf32>
    %cst_7 = arith.constant 1.000000e+00 : f32
    %19 = vector.broadcast %cst_7 : f32 to vector<4x128xf32>
    %20 = arith.addf %19, %18 : vector<4x128xf32>
    %21 = arith.divf %19, %20 : vector<4x128xf32>
    %cst_8 = arith.constant 2.000000e+00 : f32
    %22 = vector.broadcast %cst_8 : f32 to vector<4x128xf32>
    %23 = arith.mulf %22, %21 : vector<4x128xf32>
    %cst_9 = arith.constant 1.000000e+00 : f32
    %24 = vector.broadcast %cst_9 : f32 to vector<4x128xf32>
    %25 = arith.subf %23, %24 : vector<4x128xf32>
    %26 = arith.select %11, %25, %21 : vector<4x128xi1>, vector<4x128xf32>
    %27 = vector.extract_strided_slice %26 {offsets = [0, 0], sizes = [4, 32], strides = [1, 1]} : vector<4x128xf32> to vector<4x32xf32>
    %28 = vector.extract_strided_slice %26 {offsets = [0, 32], sizes = [4, 32], strides = [1, 1]} : vector<4x128xf32> to vector<4x32xf32>
    %29 = vector.extract_strided_slice %26 {offsets = [0, 64], sizes = [4, 32], strides = [1, 1]} : vector<4x128xf32> to vector<4x32xf32>
    %30 = vector.extract_strided_slice %26 {offsets = [0, 96], sizes = [4, 32], strides = [1, 1]} : vector<4x128xf32> to vector<4x32xf32>
    %31 = arith.mulf %28, %1 : vector<4x32xf32>
    %32 = arith.mulf %27, %29 : vector<4x32xf32>
    %33 = arith.addf %31, %32 : vector<4x32xf32>
    %34 = math.tanh %33 : vector<4x32xf32>
    %35 = arith.mulf %30, %34 : vector<4x32xf32>
    %c0_10 = arith.constant 0 : index
    %c0_11 = arith.constant 0 : index
    %c0_12 = arith.constant 0 : index
    %36 = vector.load %arg4[%c0_10, %c0_11, %c0_12] : memref<8x4x32xf32, #tpu.memory_space<vmem>>, vector<1x4x32xf32>
    %37 = vector.shape_cast %36 : vector<1x4x32xf32> to vector<4x32xf32>
    %38 = vector.shape_cast %35 : vector<4x32xf32> to vector<1x4x32xf32>
    tpu.vector_store %arg4[%c0_10, %c0_11, %c0_12], %38 {strides = array<i32>} : memref<8x4x32xf32, #tpu.memory_space<vmem>>, vector<1x4x32xf32>,
    %cst_13 = arith.constant dense<0.000000e+00> : vector<4x128xf32>
    %39 = tpu.matmul %35, %2, %cst_13 {dimension_numbers = #tpu.dot_dimension_numbers<[1], [0], [0], [1], [0, 0, 1, 1], [], []>} : vector<4x32xf32>, vector<32x128xf32>, vector<4x128xf32> -> vector<4x128xf32>
    %40 = arith.addf %39, %5 : vector<4x128xf32>
    %cst_14 = arith.constant 2.000000e+00 : f32
    %41 = vector.broadcast %cst_14 : f32 to vector<4x128xf32>
    %42 = arith.mulf %41, %40 : vector<4x128xf32>
    %43 = arith.select %11, %42, %40 : vector<4x128xi1>, vector<4x128xf32>
    %44 = arith.negf %43 : vector<4x128xf32>
    %45 = math.exp %44 : vector<4x128xf32>
    %cst_15 = arith.constant 1.000000e+00 : f32
    %46 = vector.broadcast %cst_15 : f32 to vector<4x128xf32>
    %47 = arith.addf %46, %45 : vector<4x128xf32>
    %48 = arith.divf %46, %47 : vector<4x128xf32>
    %cst_16 = arith.constant 2.000000e+00 : f32
    %49 = vector.broadcast %cst_16 : f32 to vector<4x128xf32>
    %50 = arith.mulf %49, %48 : vector<4x128xf32>
    %cst_17 = arith.constant 1.000000e+00 : f32
    %51 = vector.broadcast %cst_17 : f32 to vector<4x128xf32>
    %52 = arith.subf %50, %51 : vector<4x128xf32>
    %53 = arith.select %11, %52, %48 : vector<4x128xi1>, vector<4x128xf32>
    %54 = vector.extract_strided_slice %53 {offsets = [0, 0], sizes = [4, 32], strides = [1, 1]} : vector<4x128xf32> to vector<4x32xf32>
    %55 = vector.extract_strided_slice %53 {offsets = [0, 32], sizes = [4, 32], strides = [1, 1]} : vector<4x128xf32> to vector<4x32xf32>
    %56 = vector.extract_strided_slice %53 {offsets = [0, 64], sizes = [4, 32], strides = [1, 1]} : vector<4x128xf32> to vector<4x32xf32>
    %57 = vector.extract_strided_slice %53 {offsets = [0, 96], sizes = [4, 32], strides = [1, 1]} : vector<4x128xf32> to vector<4x32xf32>
    %58 = arith.mulf %55, %33 : vector<4x32xf32>
    %59 = arith.mulf %54, %56 : vector<4x32xf32>
    %60 = arith.addf %58, %59 : vector<4x32xf32>
    %61 = math.tanh %60 : vector<4x32xf32>
    %62 = arith.mulf %57, %61 : vector<4x32xf32>
    %c1 = arith.constant 1 : index
    %c0_18 = arith.constant 0 : index
    %c0_19 = arith.constant 0 : index
    %63 = vector.load %arg4[%c1, %c0_18, %c0_19] : memref<8x4x32xf32, #tpu.memory_space<vmem>>, vector<1x4x32xf32>
    %64 = vector.shape_cast %63 : vector<1x4x32xf32> to vector<4x32xf32>
    %65 = vector.shape_cast %62 : vector<4x32xf32> to vector<1x4x32xf32>
    tpu.vector_store %arg4[%c1, %c0_18, %c0_19], %65 {strides = array<i32>} : memref<8x4x32xf32, #tpu.memory_space<vmem>>, vector<1x4x32xf32>,
    %cst_20 = arith.constant dense<0.000000e+00> : vector<4x128xf32>
    %66 = tpu.matmul %62, %2, %cst_20 {dimension_numbers = #tpu.dot_dimension_numbers<[1], [0], [0], [1], [0, 0, 1, 1], [], []>} : vector<4x32xf32>, vector<32x128xf32>, vector<4x128xf32> -> vector<4x128xf32>
    %67 = arith.addf %66, %5 : vector<4x128xf32>
    %cst_21 = arith.constant 2.000000e+00 : f32
    %68 = vector.broadcast %cst_21 : f32 to vector<4x128xf32>
    %69 = arith.mulf %68, %67 : vector<4x128xf32>
    %70 = arith.select %11, %69, %67 : vector<4x128xi1>, vector<4x128xf32>
    %71 = arith.negf %70 : vector<4x128xf32>
    %72 = math.exp %71 : vector<4x128xf32>
    %cst_22 = arith.constant 1.000000e+00 : f32
    %73 = vector.broadcast %cst_22 : f32 to vector<4x128xf32>
    %74 = arith.addf %73, %72 : vector<4x128xf32>
    %75 = arith.divf %73, %74 : vector<4x128xf32>
    %cst_23 = arith.constant 2.000000e+00 : f32
    %76 = vector.broadcast %cst_23 : f32 to vector<4x128xf32>
    %77 = arith.mulf %76, %75 : vector<4x128xf32>
    %cst_24 = arith.constant 1.000000e+00 : f32
    %78 = vector.broadcast %cst_24 : f32 to vector<4x128xf32>
    %79 = arith.subf %77, %78 : vector<4x128xf32>
    %80 = arith.select %11, %79, %75 : vector<4x128xi1>, vector<4x128xf32>
    %81 = vector.extract_strided_slice %80 {offsets = [0, 0], sizes = [4, 32], strides = [1, 1]} : vector<4x128xf32> to vector<4x32xf32>
    %82 = vector.extract_strided_slice %80 {offsets = [0, 32], sizes = [4, 32], strides = [1, 1]} : vector<4x128xf32> to vector<4x32xf32>
    %83 = vector.extract_strided_slice %80 {offsets = [0, 64], sizes = [4, 32], strides = [1, 1]} : vector<4x128xf32> to vector<4x32xf32>
    %84 = vector.extract_strided_slice %80 {offsets = [0, 96], sizes = [4, 32], strides = [1, 1]} : vector<4x128xf32> to vector<4x32xf32>
    %85 = arith.mulf %82, %60 : vector<4x32xf32>
    %86 = arith.mulf %81, %83 : vector<4x32xf32>
    %87 = arith.addf %85, %86 : vector<4x32xf32>
    %88 = math.tanh %87 : vector<4x32xf32>
    %89 = arith.mulf %84, %88 : vector<4x32xf32>
    %c2 = arith.constant 2 : index
    %c0_25 = arith.constant 0 : index
    %c0_26 = arith.constant 0 : index
    %90 = vector.load %arg4[%c2, %c0_25, %c0_26] : memref<8x4x32xf32, #tpu.memory_space<vmem>>, vector<1x4x32xf32>
    %91 = vector.shape_cast %90 : vector<1x4x32xf32> to vector<4x32xf32>
    %92 = vector.shape_cast %89 : vector<4x32xf32> to vector<1x4x32xf32>
    tpu.vector_store %arg4[%c2, %c0_25, %c0_26], %92 {strides = array<i32>} : memref<8x4x32xf32, #tpu.memory_space<vmem>>, vector<1x4x32xf32>,
    %cst_27 = arith.constant dense<0.000000e+00> : vector<4x128xf32>
    %93 = tpu.matmul %89, %2, %cst_27 {dimension_numbers = #tpu.dot_dimension_numbers<[1], [0], [0], [1], [0, 0, 1, 1], [], []>} : vector<4x32xf32>, vector<32x128xf32>, vector<4x128xf32> -> vector<4x128xf32>
    %94 = arith.addf %93, %5 : vector<4x128xf32>
    %cst_28 = arith.constant 2.000000e+00 : f32
    %95 = vector.broadcast %cst_28 : f32 to vector<4x128xf32>
    %96 = arith.mulf %95, %94 : vector<4x128xf32>
    %97 = arith.select %11, %96, %94 : vector<4x128xi1>, vector<4x128xf32>
    %98 = arith.negf %97 : vector<4x128xf32>
    %99 = math.exp %98 : vector<4x128xf32>
    %cst_29 = arith.constant 1.000000e+00 : f32
    %100 = vector.broadcast %cst_29 : f32 to vector<4x128xf32>
    %101 = arith.addf %100, %99 : vector<4x128xf32>
    %102 = arith.divf %100, %101 : vector<4x128xf32>
    %cst_30 = arith.constant 2.000000e+00 : f32
    %103 = vector.broadcast %cst_30 : f32 to vector<4x128xf32>
    %104 = arith.mulf %103, %102 : vector<4x128xf32>
    %cst_31 = arith.constant 1.000000e+00 : f32
    %105 = vector.broadcast %cst_31 : f32 to vector<4x128xf32>
    %106 = arith.subf %104, %105 : vector<4x128xf32>
    %107 = arith.select %11, %106, %102 : vector<4x128xi1>, vector<4x128xf32>
    %108 = vector.extract_strided_slice %107 {offsets = [0, 0], sizes = [4, 32], strides = [1, 1]} : vector<4x128xf32> to vector<4x32xf32>
    %109 = vector.extract_strided_slice %107 {offsets = [0, 32], sizes = [4, 32], strides = [1, 1]} : vector<4x128xf32> to vector<4x32xf32>
    %110 = vector.extract_strided_slice %107 {offsets = [0, 64], sizes = [4, 32], strides = [1, 1]} : vector<4x128xf32> to vector<4x32xf32>
    %111 = vector.extract_strided_slice %107 {offsets = [0, 96], sizes = [4, 32], strides = [1, 1]} : vector<4x128xf32> to vector<4x32xf32>
    %112 = arith.mulf %109, %87 : vector<4x32xf32>
    %113 = arith.mulf %108, %110 : vector<4x32xf32>
    %114 = arith.addf %112, %113 : vector<4x32xf32>
    %115 = math.tanh %114 : vector<4x32xf32>
    %116 = arith.mulf %111, %115 : vector<4x32xf32>
    %c3 = arith.constant 3 : index
    %c0_32 = arith.constant 0 : index
    %c0_33 = arith.constant 0 : index
    %117 = vector.load %arg4[%c3, %c0_32, %c0_33] : memref<8x4x32xf32, #tpu.memory_space<vmem>>, vector<1x4x32xf32>
    %118 = vector.shape_cast %117 : vector<1x4x32xf32> to vector<4x32xf32>
    %119 = vector.shape_cast %116 : vector<4x32xf32> to vector<1x4x32xf32>
    tpu.vector_store %arg4[%c3, %c0_32, %c0_33], %119 {strides = array<i32>} : memref<8x4x32xf32, #tpu.memory_space<vmem>>, vector<1x4x32xf32>,
    %cst_34 = arith.constant dense<0.000000e+00> : vector<4x128xf32>
    %120 = tpu.matmul %116, %2, %cst_34 {dimension_numbers = #tpu.dot_dimension_numbers<[1], [0], [0], [1], [0, 0, 1, 1], [], []>} : vector<4x32xf32>, vector<32x128xf32>, vector<4x128xf32> -> vector<4x128xf32>
    %121 = arith.addf %120, %5 : vector<4x128xf32>
    %cst_35 = arith.constant 2.000000e+00 : f32
    %122 = vector.broadcast %cst_35 : f32 to vector<4x128xf32>
    %123 = arith.mulf %122, %121 : vector<4x128xf32>
    %124 = arith.select %11, %123, %121 : vector<4x128xi1>, vector<4x128xf32>
    %125 = arith.negf %124 : vector<4x128xf32>
    %126 = math.exp %125 : vector<4x128xf32>
    %cst_36 = arith.constant 1.000000e+00 : f32
    %127 = vector.broadcast %cst_36 : f32 to vector<4x128xf32>
    %128 = arith.addf %127, %126 : vector<4x128xf32>
    %129 = arith.divf %127, %128 : vector<4x128xf32>
    %cst_37 = arith.constant 2.000000e+00 : f32
    %130 = vector.broadcast %cst_37 : f32 to vector<4x128xf32>
    %131 = arith.mulf %130, %129 : vector<4x128xf32>
    %cst_38 = arith.constant 1.000000e+00 : f32
    %132 = vector.broadcast %cst_38 : f32 to vector<4x128xf32>
    %133 = arith.subf %131, %132 : vector<4x128xf32>
    %134 = arith.select %11, %133, %129 : vector<4x128xi1>, vector<4x128xf32>
    %135 = vector.extract_strided_slice %134 {offsets = [0, 0], sizes = [4, 32], strides = [1, 1]} : vector<4x128xf32> to vector<4x32xf32>
    %136 = vector.extract_strided_slice %134 {offsets = [0, 32], sizes = [4, 32], strides = [1, 1]} : vector<4x128xf32> to vector<4x32xf32>
    %137 = vector.extract_strided_slice %134 {offsets = [0, 64], sizes = [4, 32], strides = [1, 1]} : vector<4x128xf32> to vector<4x32xf32>
    %138 = vector.extract_strided_slice %134 {offsets = [0, 96], sizes = [4, 32], strides = [1, 1]} : vector<4x128xf32> to vector<4x32xf32>
    %139 = arith.mulf %136, %114 : vector<4x32xf32>
    %140 = arith.mulf %135, %137 : vector<4x32xf32>
    %141 = arith.addf %139, %140 : vector<4x32xf32>
    %142 = math.tanh %141 : vector<4x32xf32>
    %143 = arith.mulf %138, %142 : vector<4x32xf32>
    %c4 = arith.constant 4 : index
    %c0_39 = arith.constant 0 : index
    %c0_40 = arith.constant 0 : index
    %144 = vector.load %arg4[%c4, %c0_39, %c0_40] : memref<8x4x32xf32, #tpu.memory_space<vmem>>, vector<1x4x32xf32>
    %145 = vector.shape_cast %144 : vector<1x4x32xf32> to vector<4x32xf32>
    %146 = vector.shape_cast %143 : vector<4x32xf32> to vector<1x4x32xf32>
    tpu.vector_store %arg4[%c4, %c0_39, %c0_40], %146 {strides = array<i32>} : memref<8x4x32xf32, #tpu.memory_space<vmem>>, vector<1x4x32xf32>,
    %cst_41 = arith.constant dense<0.000000e+00> : vector<4x128xf32>
    %147 = tpu.matmul %143, %2, %cst_41 {dimension_numbers = #tpu.dot_dimension_numbers<[1], [0], [0], [1], [0, 0, 1, 1], [], []>} : vector<4x32xf32>, vector<32x128xf32>, vector<4x128xf32> -> vector<4x128xf32>
    %148 = arith.addf %147, %5 : vector<4x128xf32>
    %cst_42 = arith.constant 2.000000e+00 : f32
    %149 = vector.broadcast %cst_42 : f32 to vector<4x128xf32>
    %150 = arith.mulf %149, %148 : vector<4x128xf32>
    %151 = arith.select %11, %150, %148 : vector<4x128xi1>, vector<4x128xf32>
    %152 = arith.negf %151 : vector<4x128xf32>
    %153 = math.exp %152 : vector<4x128xf32>
    %cst_43 = arith.constant 1.000000e+00 : f32
    %154 = vector.broadcast %cst_43 : f32 to vector<4x128xf32>
    %155 = arith.addf %154, %153 : vector<4x128xf32>
    %156 = arith.divf %154, %155 : vector<4x128xf32>
    %cst_44 = arith.constant 2.000000e+00 : f32
    %157 = vector.broadcast %cst_44 : f32 to vector<4x128xf32>
    %158 = arith.mulf %157, %156 : vector<4x128xf32>
    %cst_45 = arith.constant 1.000000e+00 : f32
    %159 = vector.broadcast %cst_45 : f32 to vector<4x128xf32>
    %160 = arith.subf %158, %159 : vector<4x128xf32>
    %161 = arith.select %11, %160, %156 : vector<4x128xi1>, vector<4x128xf32>
    %162 = vector.extract_strided_slice %161 {offsets = [0, 0], sizes = [4, 32], strides = [1, 1]} : vector<4x128xf32> to vector<4x32xf32>
    %163 = vector.extract_strided_slice %161 {offsets = [0, 32], sizes = [4, 32], strides = [1, 1]} : vector<4x128xf32> to vector<4x32xf32>
    %164 = vector.extract_strided_slice %161 {offsets = [0, 64], sizes = [4, 32], strides = [1, 1]} : vector<4x128xf32> to vector<4x32xf32>
    %165 = vector.extract_strided_slice %161 {offsets = [0, 96], sizes = [4, 32], strides = [1, 1]} : vector<4x128xf32> to vector<4x32xf32>
    %166 = arith.mulf %163, %141 : vector<4x32xf32>
    %167 = arith.mulf %162, %164 : vector<4x32xf32>
    %168 = arith.addf %166, %167 : vector<4x32xf32>
    %169 = math.tanh %168 : vector<4x32xf32>
    %170 = arith.mulf %165, %169 : vector<4x32xf32>
    %c5 = arith.constant 5 : index
    %c0_46 = arith.constant 0 : index
    %c0_47 = arith.constant 0 : index
    %171 = vector.load %arg4[%c5, %c0_46, %c0_47] : memref<8x4x32xf32, #tpu.memory_space<vmem>>, vector<1x4x32xf32>
    %172 = vector.shape_cast %171 : vector<1x4x32xf32> to vector<4x32xf32>
    %173 = vector.shape_cast %170 : vector<4x32xf32> to vector<1x4x32xf32>
    tpu.vector_store %arg4[%c5, %c0_46, %c0_47], %173 {strides = array<i32>} : memref<8x4x32xf32, #tpu.memory_space<vmem>>, vector<1x4x32xf32>,
    %cst_48 = arith.constant dense<0.000000e+00> : vector<4x128xf32>
    %174 = tpu.matmul %170, %2, %cst_48 {dimension_numbers = #tpu.dot_dimension_numbers<[1], [0], [0], [1], [0, 0, 1, 1], [], []>} : vector<4x32xf32>, vector<32x128xf32>, vector<4x128xf32> -> vector<4x128xf32>
    %175 = arith.addf %174, %5 : vector<4x128xf32>
    %cst_49 = arith.constant 2.000000e+00 : f32
    %176 = vector.broadcast %cst_49 : f32 to vector<4x128xf32>
    %177 = arith.mulf %176, %175 : vector<4x128xf32>
    %178 = arith.select %11, %177, %175 : vector<4x128xi1>, vector<4x128xf32>
    %179 = arith.negf %178 : vector<4x128xf32>
    %180 = math.exp %179 : vector<4x128xf32>
    %cst_50 = arith.constant 1.000000e+00 : f32
    %181 = vector.broadcast %cst_50 : f32 to vector<4x128xf32>
    %182 = arith.addf %181, %180 : vector<4x128xf32>
    %183 = arith.divf %181, %182 : vector<4x128xf32>
    %cst_51 = arith.constant 2.000000e+00 : f32
    %184 = vector.broadcast %cst_51 : f32 to vector<4x128xf32>
    %185 = arith.mulf %184, %183 : vector<4x128xf32>
    %cst_52 = arith.constant 1.000000e+00 : f32
    %186 = vector.broadcast %cst_52 : f32 to vector<4x128xf32>
    %187 = arith.subf %185, %186 : vector<4x128xf32>
    %188 = arith.select %11, %187, %183 : vector<4x128xi1>, vector<4x128xf32>
    %189 = vector.extract_strided_slice %188 {offsets = [0, 0], sizes = [4, 32], strides = [1, 1]} : vector<4x128xf32> to vector<4x32xf32>
    %190 = vector.extract_strided_slice %188 {offsets = [0, 32], sizes = [4, 32], strides = [1, 1]} : vector<4x128xf32> to vector<4x32xf32>
    %191 = vector.extract_strided_slice %188 {offsets = [0, 64], sizes = [4, 32], strides = [1, 1]} : vector<4x128xf32> to vector<4x32xf32>
    %192 = vector.extract_strided_slice %188 {offsets = [0, 96], sizes = [4, 32], strides = [1, 1]} : vector<4x128xf32> to vector<4x32xf32>
    %193 = arith.mulf %190, %168 : vector<4x32xf32>
    %194 = arith.mulf %189, %191 : vector<4x32xf32>
    %195 = arith.addf %193, %194 : vector<4x32xf32>
    %196 = math.tanh %195 : vector<4x32xf32>
    %197 = arith.mulf %192, %196 : vector<4x32xf32>
    %c6 = arith.constant 6 : index
    %c0_53 = arith.constant 0 : index
    %c0_54 = arith.constant 0 : index
    %198 = vector.load %arg4[%c6, %c0_53, %c0_54] : memref<8x4x32xf32, #tpu.memory_space<vmem>>, vector<1x4x32xf32>
    %199 = vector.shape_cast %198 : vector<1x4x32xf32> to vector<4x32xf32>
    %200 = vector.shape_cast %197 : vector<4x32xf32> to vector<1x4x32xf32>
    tpu.vector_store %arg4[%c6, %c0_53, %c0_54], %200 {strides = array<i32>} : memref<8x4x32xf32, #tpu.memory_space<vmem>>, vector<1x4x32xf32>,
    %cst_55 = arith.constant dense<0.000000e+00> : vector<4x128xf32>
    %201 = tpu.matmul %197, %2, %cst_55 {dimension_numbers = #tpu.dot_dimension_numbers<[1], [0], [0], [1], [0, 0, 1, 1], [], []>} : vector<4x32xf32>, vector<32x128xf32>, vector<4x128xf32> -> vector<4x128xf32>
    %202 = arith.addf %201, %5 : vector<4x128xf32>
    %cst_56 = arith.constant 2.000000e+00 : f32
    %203 = vector.broadcast %cst_56 : f32 to vector<4x128xf32>
    %204 = arith.mulf %203, %202 : vector<4x128xf32>
    %205 = arith.select %11, %204, %202 : vector<4x128xi1>, vector<4x128xf32>
    %206 = arith.negf %205 : vector<4x128xf32>
    %207 = math.exp %206 : vector<4x128xf32>
    %cst_57 = arith.constant 1.000000e+00 : f32
    %208 = vector.broadcast %cst_57 : f32 to vector<4x128xf32>
    %209 = arith.addf %208, %207 : vector<4x128xf32>
    %210 = arith.divf %208, %209 : vector<4x128xf32>
    %cst_58 = arith.constant 2.000000e+00 : f32
    %211 = vector.broadcast %cst_58 : f32 to vector<4x128xf32>
    %212 = arith.mulf %211, %210 : vector<4x128xf32>
    %cst_59 = arith.constant 1.000000e+00 : f32
    %213 = vector.broadcast %cst_59 : f32 to vector<4x128xf32>
    %214 = arith.subf %212, %213 : vector<4x128xf32>
    %215 = arith.select %11, %214, %210 : vector<4x128xi1>, vector<4x128xf32>
    %216 = vector.extract_strided_slice %215 {offsets = [0, 0], sizes = [4, 32], strides = [1, 1]} : vector<4x128xf32> to vector<4x32xf32>
    %217 = vector.extract_strided_slice %215 {offsets = [0, 32], sizes = [4, 32], strides = [1, 1]} : vector<4x128xf32> to vector<4x32xf32>
    %218 = vector.extract_strided_slice %215 {offsets = [0, 64], sizes = [4, 32], strides = [1, 1]} : vector<4x128xf32> to vector<4x32xf32>
    %219 = vector.extract_strided_slice %215 {offsets = [0, 96], sizes = [4, 32], strides = [1, 1]} : vector<4x128xf32> to vector<4x32xf32>
    %220 = arith.mulf %217, %195 : vector<4x32xf32>
    %221 = arith.mulf %216, %218 : vector<4x32xf32>
    %222 = arith.addf %220, %221 : vector<4x32xf32>
    %223 = math.tanh %222 : vector<4x32xf32>
    %224 = arith.mulf %219, %223 : vector<4x32xf32>
    %c7 = arith.constant 7 : index
    %c0_60 = arith.constant 0 : index
    %c0_61 = arith.constant 0 : index
    %225 = vector.load %arg4[%c7, %c0_60, %c0_61] : memref<8x4x32xf32, #tpu.memory_space<vmem>>, vector<1x4x32xf32>
    %226 = vector.shape_cast %225 : vector<1x4x32xf32> to vector<4x32xf32>
    %227 = vector.shape_cast %224 : vector<4x32xf32> to vector<1x4x32xf32>
    tpu.vector_store %arg4[%c7, %c0_60, %c0_61], %227 {strides = array<i32>} : memref<8x4x32xf32, #tpu.memory_space<vmem>>, vector<1x4x32xf32>,
    return
  }
  func.func @transform_0(%arg0: i32) -> (i32, i32) {
    %c0_i32 = arith.constant 0 : i32
    %c0_i32_0 = arith.constant 0 : i32
    %c0_i32_1 = arith.constant 0 : i32
    return %c0_i32, %c0_i32_0 : i32, i32
  }
  func.func @transform_1(%arg0: i32) -> (i32, i32) {
    %c0_i32 = arith.constant 0 : i32
    %c0_i32_0 = arith.constant 0 : i32
    %c0_i32_1 = arith.constant 0 : i32
    return %c0_i32, %c0_i32_0 : i32, i32
  }
  func.func @transform_2(%arg0: i32) -> (i32, i32) {
    %c0_i32 = arith.constant 0 : i32
    %c0_i32_0 = arith.constant 0 : i32
    %c0_i32_1 = arith.constant 0 : i32
    return %c0_i32, %c0_i32_0 : i32, i32
  }
  func.func @transform_3(%arg0: i32) -> (i32, i32, i32) {
    %c0_i32 = arith.constant 0 : i32
    %c0_i32_0 = arith.constant 0 : i32
    %c0_i32_1 = arith.constant 0 : i32
    %c0_i32_2 = arith.constant 0 : i32
    return %c0_i32, %c0_i32_0, %c0_i32_1 : i32, i32, i32
  }
}

</mosaic_0001>

<llo_original>
// kernel: tpu_custom_call.1
$region0: #{tpu_custom_call.1}
  #allocation0 [shape = 'u32[]', space=smem, size = 0x4, offset = 0x4, fixed_abs, tag = 'smem constant byte address 0x4 - core index']
  #allocation1 [shape = 'u32[144,128]{1,0:T(1,128)}', space=vmem, size = 0x12000, scoped, tag = 'internal scratch']
  %s0 = inlined_call_operand.hbm [shape: f32[4,32], index: 0, kind: input, shape index: {}]
  %s1 = inlined_call_operand.hbm [shape: f32[32,128], index: 1, kind: input, shape index: {}]
  %s2 = inlined_call_operand.vmem [shape: f32[1,128], index: 2, kind: input, shape index: {}]
  %s3 = inlined_call_operand.hbm [shape: f32[8,4,32], index: 3, kind: output, shape index: {}]
  %s4 = sld [smem:[#allocation0]]
  $region30: #{tpu_custom_call.1} parent=0
    _
  %s6 = ssub.s32 1, %s4
  %s7 = scalar_select 0, %s6, %s4
  $region1: #{tpu_custom_call.1} parent=0
    #allocation2 [shape = 'u8[2048]{0}', space=vmem, size = 0x800, scoped, tag = 'input window, operand 0, single buffered']
    #allocation3 [shape = 's32[1]{0}', space=sflag, size = 0x4, scoped, tag = 'scoped memory for tpu_custom_call.1']
    #allocation4 [shape = 's32[1]{0}', space=sflag, size = 0x4, scoped, tag = 'scoped memory for tpu_custom_call.1']
    #allocation5 [shape = 'u8[16384]{0}', space=vmem, size = 0x4000, scoped, tag = 'input window, operand 1, single buffered']
    #allocation6 [shape = 's32[1]{0}', space=sflag, size = 0x4, scoped, tag = 'scoped memory for tpu_custom_call.1']
    #allocation7 [shape = 'u8[16384]{0}', space=vmem, size = 0x4000, scoped, tag = 'output window, operand 0, single buffered']
    %8 = vsyncpa [#allocation3], 0
    %9 = vsyncpa [#allocation6], 0
    %10 = vsyncpa [#allocation4], 0
    // Predicated region
    $region2: #{tpu_custom_call.1} parent=1 // pred_check
      _
    $region3: #{tpu_custom_call.1} parent=1 // pred_check_branch
      %12 = sbr.rel (0) target = $region5
    $region4: #{tpu_custom_call.1} parent=1 // pred_region
      %s14 = ssub.s32 64, 64
      %15 = vsyncadd [#allocation3], %s14
      %s17 = sshll.u32 [#allocation2], 4
      %s18 = int_to_ptr.vmem [resolvable:$true] %s17
      %20 = dma.hbm_to_vmem [thread:$0]  %s0, 64, %s18, [#allocation3]
    $region5: #{tpu_custom_call.1} parent=1 // pred_fallthru
      _
    // Predicated region
    $region6: #{tpu_custom_call.1} parent=1 // pred_check
      _
    $region7: #{tpu_custom_call.1} parent=1 // pred_check_branch
      %22 = sbr.rel (0) target = $region9
    $region8: #{tpu_custom_call.1} parent=1 // pred_region
      %s24 = ssub.s32 512, 512
      %25 = vsyncadd [#allocation6], %s24
      %s26 = sshll.u32 [#allocation5], 4
      %s27 = int_to_ptr.vmem [resolvable:$true] %s26
      %32 = dma.hbm_to_vmem [thread:$0]  %s1, 512, %s27, [#allocation6], 128, 128, 8
    $region9: #{tpu_custom_call.1} parent=1 // pred_fallthru
      _
    // Predicated region
    $region10: #{tpu_custom_call.1} parent=1 // pred_check
      _
    $region11: #{tpu_custom_call.1} parent=1 // pred_check_branch
      %34 = sbr.rel (0) target = $region13
    $region12: #{tpu_custom_call.1} parent=1 // pred_region
      _
    $region13: #{tpu_custom_call.1} parent=1 // pred_fallthru
      _
    // Predicated region
    $region14: #{tpu_custom_call.1} parent=1 // pred_check
      _
    $region15: #{tpu_custom_call.1} parent=1 // pred_check_branch
      %36 = sbr.rel (0) target = $region17
    $region16: #{tpu_custom_call.1} parent=1 // pred_region
      %37 = dma.done [#allocation3], 64
    $region17: #{tpu_custom_call.1} parent=1 // pred_fallthru
      _
    // Predicated region
    $region18: #{tpu_custom_call.1} parent=1 // pred_check
      _
    $region19: #{tpu_custom_call.1} parent=1 // pred_check_branch
      %39 = sbr.rel (0) target = $region21
    $region20: #{tpu_custom_call.1} parent=1 // pred_region
      %40 = dma.done [#allocation6], 512
    $region21: #{tpu_custom_call.1} parent=1 // pred_fallthru
      _
    %v41 = vld [vmem:[#allocation2] sm:$0xf]
    %v42 = vld [vmem:[#allocation5] sm:$0xff]
    %v43 = vld [vmem:[#allocation5 + $0x8] sm:$0xff]
    %v44 = vld [vmem:[#allocation5 + $0x10] sm:$0xff]
    %v45 = vld [vmem:[#allocation5 + $0x18] sm:$0xff]
    %v46 = vld [vmem:[%s2] sm:$0x1]
    %v48 = vlaneseq
    %v49 = vshrl.u32 %v48, 7
    %v50 = vsub.s32 0, %v49
    %v51 = vrot.slane %v46, %v50
    %v53 = vlaneseq
    %v54 = vand.u32 %v53, 127
    %vm55 = vcmp.ge.s32.totalorder %v54, 64
    %vm56 = vcmp.lt.s32.totalorder %v54, 96
    %vm57 = vmand %vm55, %vm56
    %vm58 = vcmask 261120
    %v60 = vsel %vm58, %v41, 0
    %62 = vmatprep.subr.mxu0 0.0
    %63 = vmatpush1.msra.mxu0 %v42
    %64 = vmatprep.subr.mxu0 0.0
    %65 = vmatpush1.msra.mxu0 %v43
    %66 = vmatprep.subr.mxu0 0.0
    %67 = vmatpush1.msra.mxu0 %v44
    %68 = vmatprep.subr.mxu0 0.0
    %69 = vmatpush1.msra.mxu0 %v45
    %70 = vmatprep.subr.mxu0 0.0
    %71 = vmatpush1.msra.mxu0 0.0
    %72 = vmatprep.subr.mxu0 0.0
    %73 = vmatpush1.msra.mxu0 0.0
    %74 = vmatprep.subr.mxu0 0.0
    %75 = vmatpush1.msra.mxu0 0.0
    %76 = vmatprep.subr.mxu0 0.0
    %77 = vmatpush1.msra.mxu0 0.0
    %78 = vmatprep.subr.mxu0 0.0
    %79 = vmatpush1.msra.mxu0 0.0
    %80 = vmatprep.subr.mxu0 0.0
    %81 = vmatpush1.msra.mxu0 0.0
    %82 = vmatprep.subr.mxu0 0.0
    %83 = vmatpush1.msra.mxu0 0.0
    %84 = vmatprep.subr.mxu0 0.0
    %85 = vmatpush1.msra.mxu0 0.0
    %86 = vmatprep.subr.mxu0 0.0
    %87 = vmatpush1.msra.mxu0 0.0
    %88 = vmatprep.subr.mxu0 0.0
    %89 = vmatpush1.msra.mxu0 0.0
    %90 = vmatprep.subr.mxu0 0.0
    %91 = vmatpush1.msra.mxu0 0.0
    %92 = vmatprep.subr.mxu0 0.0
    %93 = vmatpush1.msra.mxu0 0.0
    %94 = vmatprep.subr.mxu0 0.0
    %95 = vmatpush1.msra.mxu0 0.0
    %96 = vmatprep.subr.mxu0 0.0
    %97 = vmatpush1.msra.mxu0 0.0
    %98 = vmatprep.subr.mxu0 0.0
    %99 = vmatpush1.msra.mxu0 0.0
    %100 = vmatprep.subr.mxu0 0.0
    %101 = vmatpush1.msra.mxu0 0.0
    %102 = vmatprep.subr.mxu0 0.0
    %103 = vmatpush1.msra.mxu0 0.0
    %104 = vmatprep.subr.mxu0 0.0
    %105 = vmatpush1.msra.mxu0 0.0
    %106 = vmatprep.subr.mxu0 0.0
    %107 = vmatpush1.msra.mxu0 0.0
    %108 = vmatprep.subr.mxu0 0.0
    %109 = vmatpush1.msra.mxu0 0.0
    %110 = vmatprep.subr.mxu0 0.0
    %111 = vmatpush1.msra.mxu0 0.0
    %112 = vmatprep.subr.mxu0 0.0
    %113 = vmatpush1.msra.mxu0 0.0
    %114 = vmatprep.subr.mxu0 0.0
    %115 = vmatpush1.msra.mxu0 0.0
    %116 = vmatprep.subr.mxu0 0.0
    %117 = vmatpush1.msra.mxu0 0.0
    %118 = vmatprep.subr.mxu0 0.0
    %119 = vmatpush1.msra.mxu0 0.0
    %120 = vmatprep.subr.mxu0 0.0
    %121 = vmatpush1.msra.mxu0 0.0
    %122 = vmatprep.subr.mxu0 0.0
    %123 = vmatpush1.msra.mxu0 0.0
    %124 = vmatprep.subr.mxu0 0.0
    %125 = vmatpush1.msra.mxu0 0.0
    %126 = vmatprep.mubr.f32.mxu0 0.0
    %127 = vmatmul.mubr.f32.gmra.mrb[0].mxu0 %v60
    %v128 = vpop.f32.mrb[0].mxu0
    %v129 = vadd.f32 %v51, %v128
    %v130 = vpop.f32.mrb[0].mxu0
    %131 = vdwg.mxu0
    %v132 = vmul.f32 %v129, 2.0
    %v133 = vsel %vm57, %v132, %v129
    %v134 = vxor.u32 %v133, 2147483648
    %v135 = vmul.f32 %v134, 1.442695
    %v136 = vpow.pop %v135
    %v137 = vadd.f32 %v136, 1.0
    %v138 = vrcp.pop %v137
    %v139 = vmul.f32 1.0, %v138
    %v140 = vmul.f32 %v139, 2.0
    %v141 = vsub.f32 %v140, 1.0
    %v142 = vsel %vm57, %v141, %v139
    %v143 = vmul.f32 %v142, 0.0
    %145 = vrot.lane.b32.xlu0 %v142, 64
    %v146 = vpop.permute.xlu0 %145
    %v148 = vmul.f32 %v142, %v146
    %150 = vrot.lane.b32.xlu0 %v148, 32
    %v151 = vpop.permute.xlu0 %150
    %v153 = vadd.f32 %v143, %v151
    %v154 = vtanh.pop %v153
    %156 = vrot.lane.b32.xlu0 %v154, 64
    %v157 = vpop.permute.xlu0 %156
    %v159 = vmul.f32 %v142, %v157
    %161 = vrot.lane.b32.xlu0 %v159, 32
    %v162 = vpop.permute.xlu0 %161
    %vm164 = vcmask 257024
    %165 = vst.msk [vmem:[#allocation7] sm:$0xf] %vm164, %v162
    %v166 = vsel %vm58, %v162, 0
    %168 = vmatprep.subr.mxu0 0.0
    %169 = vmatpush1.msra.mxu0 %v42
    %170 = vmatprep.subr.mxu0 0.0
    %171 = vmatpush1.msra.mxu0 %v43
    %172 = vmatprep.subr.mxu0 0.0
    %173 = vmatpush1.msra.mxu0 %v44
    %174 = vmatprep.subr.mxu0 0.0
    %175 = vmatpush1.msra.mxu0 %v45
    %176 = vmatprep.subr.mxu0 0.0
    %177 = vmatpush1.msra.mxu0 0.0
    %178 = vmatprep.subr.mxu0 0.0
    %179 = vmatpush1.msra.mxu0 0.0
    %180 = vmatprep.subr.mxu0 0.0
    %181 = vmatpush1.msra.mxu0 0.0
    %182 = vmatprep.subr.mxu0 0.0
    %183 = vmatpush1.msra.mxu0 0.0
    %184 = vmatprep.subr.mxu0 0.0
    %185 = vmatpush1.msra.mxu0 0.0
    %186 = vmatprep.subr.mxu0 0.0
    %187 = vmatpush1.msra.mxu0 0.0
    %188 = vmatprep.subr.mxu0 0.0
    %189 = vmatpush1.msra.mxu0 0.0
    %190 = vmatprep.subr.mxu0 0.0
    %191 = vmatpush1.msra.mxu0 0.0
    %192 = vmatprep.subr.mxu0 0.0
    %193 = vmatpush1.msra.mxu0 0.0
    %194 = vmatprep.subr.mxu0 0.0
    %195 = vmatpush1.msra.mxu0 0.0
    %196 = vmatprep.subr.mxu0 0.0
    %197 = vmatpush1.msra.mxu0 0.0
    %198 = vmatprep.subr.mxu0 0.0
    %199 = vmatpush1.msra.mxu0 0.0
    %200 = vmatprep.subr.mxu0 0.0
    %201 = vmatpush1.msra.mxu0 0.0
    %202 = vmatprep.subr.mxu0 0.0
    %203 = vmatpush1.msra.mxu0 0.0
    %204 = vmatprep.subr.mxu0 0.0
    %205 = vmatpush1.msra.mxu0 0.0
    %206 = vmatprep.subr.mxu0 0.0
    %207 = vmatpush1.msra.mxu0 0.0
    %208 = vmatprep.subr.mxu0 0.0
    %209 = vmatpush1.msra.mxu0 0.0
    %210 = vmatprep.subr.mxu0 0.0
    %211 = vmatpush1.msra.mxu0 0.0
    %212 = vmatprep.subr.mxu0 0.0
    %213 = vmatpush1.msra.mxu0 0.0
    %214 = vmatprep.subr.mxu0 0.0
    %215 = vmatpush1.msra.mxu0 0.0
    %216 = vmatprep.subr.mxu0 0.0
    %217 = vmatpush1.msra.mxu0 0.0
    %218 = vmatprep.subr.mxu0 0.0
    %219 = vmatpush1.msra.mxu0 0.0
    %220 = vmatprep.subr.mxu0 0.0
    %221 = vmatpush1.msra.mxu0 0.0
    %222 = vmatprep.subr.mxu0 0.0
    %223 = vmatpush1.msra.mxu0 0.0
    %224 = vmatprep.subr.mxu0 0.0
    %225 = vmatpush1.msra.mxu0 0.0
    %226 = vmatprep.subr.mxu0 0.0
    %227 = vmatpush1.msra.mxu0 0.0
    %228 = vmatprep.subr.mxu0 0.0
    %229 = vmatpush1.msra.mxu0 0.0
    %230 = vmatprep.subr.mxu0 0.0
    %231 = vmatpush1.msra.mxu0 0.0
    %232 = vmatprep.mubr.f32.mxu0 0.0
    %233 = vmatmul.mubr.f32.gmra.mrb[0].mxu0 %v166
    %v234 = vpop.f32.mrb[0].mxu0
    %v235 = vadd.f32 %v51, %v234
    %v236 = vpop.f32.mrb[0].mxu0
    %237 = vdwg.mxu0
    %v238 = vmul.f32 %v235, 2.0
    %v239 = vsel %vm57, %v238, %v235
    %v240 = vxor.u32 %v239, 2147483648
    %v241 = vmul.f32 %v240, 1.442695
    %v242 = vpow.pop %v241
    %v243 = vadd.f32 %v242, 1.0
    %v244 = vrcp.pop %v243
    %v245 = vmul.f32 1.0, %v244
    %v246 = vmul.f32 %v245, 2.0
    %v247 = vsub.f32 %v246, 1.0
    %v248 = vsel %vm57, %v247, %v245
    %v249 = vmul.f32 %v248, %v153
    %251 = vrot.lane.b32.xlu0 %v248, 64
    %v252 = vpop.permute.xlu0 %251
    %v254 = vmul.f32 %v248, %v252
    %256 = vrot.lane.b32.xlu0 %v254, 32
    %v257 = vpop.permute.xlu0 %256
    %v259 = vadd.f32 %v249, %v257
    %v260 = vtanh.pop %v259
    %262 = vrot.lane.b32.xlu0 %v260, 64
    %v263 = vpop.permute.xlu0 %262
    %v265 = vmul.f32 %v248, %v263
    %267 = vrot.lane.b32.xlu0 %v265, 32
    %v268 = vpop.permute.xlu0 %267
    %s270 = scalar_lea.vmem [#allocation7], 4
    %271 = vst.msk [vmem:[%s270] sm:$0xf] %vm164, %v268
    %v272 = vsel %vm58, %v268, 0
    %274 = vmatprep.subr.mxu0 0.0
    %275 = vmatpush1.msra.mxu0 %v42
    %276 = vmatprep.subr.mxu0 0.0
    %277 = vmatpush1.msra.mxu0 %v43
    %278 = vmatprep.subr.mxu0 0.0
    %279 = vmatpush1.msra.mxu0 %v44
    %280 = vmatprep.subr.mxu0 0.0
    %281 = vmatpush1.msra.mxu0 %v45
    %282 = vmatprep.subr.mxu0 0.0
    %283 = vmatpush1.msra.mxu0 0.0
    %284 = vmatprep.subr.mxu0 0.0
    %285 = vmatpush1.msra.mxu0 0.0
    %286 = vmatprep.subr.mxu0 0.0
    %287 = vmatpush1.msra.mxu0 0.0
    %288 = vmatprep.subr.mxu0 0.0
    %289 = vmatpush1.msra.mxu0 0.0
    %290 = vmatprep.subr.mxu0 0.0
    %291 = vmatpush1.msra.mxu0 0.0
    %292 = vmatprep.subr.mxu0 0.0
    %293 = vmatpush1.msra.mxu0 0.0
    %294 = vmatprep.subr.mxu0 0.0
    %295 = vmatpush1.msra.mxu0 0.0
    %296 = vmatprep.subr.mxu0 0.0
    %297 = vmatpush1.msra.mxu0 0.0
    %298 = vmatprep.subr.mxu0 0.0
    %299 = vmatpush1.msra.mxu0 0.0
    %300 = vmatprep.subr.mxu0 0.0
    %301 = vmatpush1.msra.mxu0 0.0
    %302 = vmatprep.subr.mxu0 0.0
    %303 = vmatpush1.msra.mxu0 0.0
    %304 = vmatprep.subr.mxu0 0.0
    %305 = vmatpush1.msra.mxu0 0.0
    %306 = vmatprep.subr.mxu0 0.0
    %307 = vmatpush1.msra.mxu0 0.0
    %308 = vmatprep.subr.mxu0 0.0
    %309 = vmatpush1.msra.mxu0 0.0
    %310 = vmatprep.subr.mxu0 0.0
    %311 = vmatpush1.msra.mxu0 0.0
    %312 = vmatprep.subr.mxu0 0.0
    %313 = vmatpush1.msra.mxu0 0.0
    %314 = vmatprep.subr.mxu0 0.0
    %315 = vmatpush1.msra.mxu0 0.0
    %316 = vmatprep.subr.mxu0 0.0
    %317 = vmatpush1.msra.mxu0 0.0
    %318 = vmatprep.subr.mxu0 0.0
    %319 = vmatpush1.msra.mxu0 0.0
    %320 = vmatprep.subr.mxu0 0.0
    %321 = vmatpush1.msra.mxu0 0.0
    %322 = vmatprep.subr.mxu0 0.0
    %323 = vmatpush1.msra.mxu0 0.0
    %324 = vmatprep.subr.mxu0 0.0
    %325 = vmatpush1.msra.mxu0 0.0
    %326 = vmatprep.subr.mxu0 0.0
    %327 = vmatpush1.msra.mxu0 0.0
    %328 = vmatprep.subr.mxu0 0.0
    %329 = vmatpush1.msra.mxu0 0.0
    %330 = vmatprep.subr.mxu0 0.0
    %331 = vmatpush1.msra.mxu0 0.0
    %332 = vmatprep.subr.mxu0 0.0
    %333 = vmatpush1.msra.mxu0 0.0
    %334 = vmatprep.subr.mxu0 0.0
    %335 = vmatpush1.msra.mxu0 0.0
    %336 = vmatprep.subr.mxu0 0.0
    %337 = vmatpush1.msra.mxu0 0.0
    %338 = vmatprep.mubr.f32.mxu0 0.0
    %339 = vmatmul.mubr.f32.gmra.mrb[0].mxu0 %v272
    %v340 = vpop.f32.mrb[0].mxu0
    %v341 = vadd.f32 %v51, %v340
    %v342 = vpop.f32.mrb[0].mxu0
    %343 = vdwg.mxu0
    %v344 = vmul.f32 %v341, 2.0
    %v345 = vsel %vm57, %v344, %v341
    %v346 = vxor.u32 %v345, 2147483648
    %v347 = vmul.f32 %v346, 1.442695
    %v348 = vpow.pop %v347
    %v349 = vadd.f32 %v348, 1.0
    %v350 = vrcp.pop %v349
    %v351 = vmul.f32 1.0, %v350
    %v352 = vmul.f32 %v351, 2.0
    %v353 = vsub.f32 %v352, 1.0
    %v354 = vsel %vm57, %v353, %v351
    %v355 = vmul.f32 %v354, %v259
    %357 = vrot.lane.b32.xlu0 %v354, 64
    %v358 = vpop.permute.xlu0 %357
    %v360 = vmul.f32 %v354, %v358
    %362 = vrot.lane.b32.xlu0 %v360, 32
    %v363 = vpop.permute.xlu0 %362
    %v365 = vadd.f32 %v355, %v363
    %v366 = vtanh.pop %v365
    %368 = vrot.lane.b32.xlu0 %v366, 64
    %v369 = vpop.permute.xlu0 %368
    %v371 = vmul.f32 %v354, %v369
    %373 = vrot.lane.b32.xlu0 %v371, 32
    %v374 = vpop.permute.xlu0 %373
    %s376 = scalar_lea.vmem [#allocation7], 8
    %377 = vst.msk [vmem:[%s376] sm:$0xf] %vm164, %v374
    %v378 = vsel %vm58, %v374, 0
    %380 = vmatprep.subr.mxu0 0.0
    %381 = vmatpush1.msra.mxu0 %v42
    %382 = vmatprep.subr.mxu0 0.0
    %383 = vmatpush1.msra.mxu0 %v43
    %384 = vmatprep.subr.mxu0 0.0
    %385 = vmatpush1.msra.mxu0 %v44
    %386 = vmatprep.subr.mxu0 0.0
    %387 = vmatpush1.msra.mxu0 %v45
    %388 = vmatprep.subr.mxu0 0.0
    %389 = vmatpush1.msra.mxu0 0.0
    %390 = vmatprep.subr.mxu0 0.0
    %391 = vmatpush1.msra.mxu0 0.0
    %392 = vmatprep.subr.mxu0 0.0
    %393 = vmatpush1.msra.mxu0 0.0
    %394 = vmatprep.subr.mxu0 0.0
    %395 = vmatpush1.msra.mxu0 0.0
    %396 = vmatprep.subr.mxu0 0.0
    %397 = vmatpush1.msra.mxu0 0.0
    %398 = vmatprep.subr.mxu0 0.0
    %399 = vmatpush1.msra.mxu0 0.0
    %400 = vmatprep.subr.mxu0 0.0
    %401 = vmatpush1.msra.mxu0 0.0
    %402 = vmatprep.subr.mxu0 0.0
    %403 = vmatpush1.msra.mxu0 0.0
    %404 = vmatprep.subr.mxu0 0.0
    %405 = vmatpush1.msra.mxu0 0.0
    %406 = vmatprep.subr.mxu0 0.0
    %407 = vmatpush1.msra.mxu0 0.0
    %408 = vmatprep.subr.mxu0 0.0
    %409 = vmatpush1.msra.mxu0 0.0
    %410 = vmatprep.subr.mxu0 0.0
    %411 = vmatpush1.msra.mxu0 0.0
    %412 = vmatprep.subr.mxu0 0.0
    %413 = vmatpush1.msra.mxu0 0.0
    %414 = vmatprep.subr.mxu0 0.0
    %415 = vmatpush1.msra.mxu0 0.0
    %416 = vmatprep.subr.mxu0 0.0
    %417 = vmatpush1.msra.mxu0 0.0
    %418 = vmatprep.subr.mxu0 0.0
    %419 = vmatpush1.msra.mxu0 0.0
    %420 = vmatprep.subr.mxu0 0.0
    %421 = vmatpush1.msra.mxu0 0.0
    %422 = vmatprep.subr.mxu0 0.0
    %423 = vmatpush1.msra.mxu0 0.0
    %424 = vmatprep.subr.mxu0 0.0
    %425 = vmatpush1.msra.mxu0 0.0
    %426 = vmatprep.subr.mxu0 0.0
    %427 = vmatpush1.msra.mxu0 0.0
    %428 = vmatprep.subr.mxu0 0.0
    %429 = vmatpush1.msra.mxu0 0.0
    %430 = vmatprep.subr.mxu0 0.0
    %431 = vmatpush1.msra.mxu0 0.0
    %432 = vmatprep.subr.mxu0 0.0
    %433 = vmatpush1.msra.mxu0 0.0
    %434 = vmatprep.subr.mxu0 0.0
    %435 = vmatpush1.msra.mxu0 0.0
    %436 = vmatprep.subr.mxu0 0.0
    %437 = vmatpush1.msra.mxu0 0.0
    %438 = vmatprep.subr.mxu0 0.0
    %439 = vmatpush1.msra.mxu0 0.0
    %440 = vmatprep.subr.mxu0 0.0
    %441 = vmatpush1.msra.mxu0 0.0
    %442 = vmatprep.subr.mxu0 0.0
    %443 = vmatpush1.msra.mxu0 0.0
    %444 = vmatprep.mubr.f32.mxu0 0.0
    %445 = vmatmul.mubr.f32.gmra.mrb[0].mxu0 %v378
    %v446 = vpop.f32.mrb[0].mxu0
    %v447 = vadd.f32 %v51, %v446
    %v448 = vpop.f32.mrb[0].mxu0
    %449 = vdwg.mxu0
    %v450 = vmul.f32 %v447, 2.0
    %v451 = vsel %vm57, %v450, %v447
    %v452 = vxor.u32 %v451, 2147483648
    %v453 = vmul.f32 %v452, 1.442695
    %v454 = vpow.pop %v453
    %v455 = vadd.f32 %v454, 1.0
    %v456 = vrcp.pop %v455
    %v457 = vmul.f32 1.0, %v456
    %v458 = vmul.f32 %v457, 2.0
    %v459 = vsub.f32 %v458, 1.0
    %v460 = vsel %vm57, %v459, %v457
    %v461 = vmul.f32 %v460, %v365
    %463 = vrot.lane.b32.xlu0 %v460, 64
    %v464 = vpop.permute.xlu0 %463
    %v466 = vmul.f32 %v460, %v464
    %468 = vrot.lane.b32.xlu0 %v466, 32
    %v469 = vpop.permute.xlu0 %468
    %v471 = vadd.f32 %v461, %v469
    %v472 = vtanh.pop %v471
    %474 = vrot.lane.b32.xlu0 %v472, 64
    %v475 = vpop.permute.xlu0 %474
    %v477 = vmul.f32 %v460, %v475
    %479 = vrot.lane.b32.xlu0 %v477, 32
    %v480 = vpop.permute.xlu0 %479
    %s482 = scalar_lea.vmem [#allocation7], 12
    %483 = vst.msk [vmem:[%s482] sm:$0xf] %vm164, %v480
    %v484 = vsel %vm58, %v480, 0
    %486 = vmatprep.subr.mxu0 0.0
    %487 = vmatpush1.msra.mxu0 %v42
    %488 = vmatprep.subr.mxu0 0.0
    %489 = vmatpush1.msra.mxu0 %v43
    %490 = vmatprep.subr.mxu0 0.0
    %491 = vmatpush1.msra.mxu0 %v44
    %492 = vmatprep.subr.mxu0 0.0
    %493 = vmatpush1.msra.mxu0 %v45
    %494 = vmatprep.subr.mxu0 0.0
    %495 = vmatpush1.msra.mxu0 0.0
    %496 = vmatprep.subr.mxu0 0.0
    %497 = vmatpush1.msra.mxu0 0.0
    %498 = vmatprep.subr.mxu0 0.0
    %499 = vmatpush1.msra.mxu0 0.0
    %500 = vmatprep.subr.mxu0 0.0
    %501 = vmatpush1.msra.mxu0 0.0
    %502 = vmatprep.subr.mxu0 0.0
    %503 = vmatpush1.msra.mxu0 0.0
    %504 = vmatprep.subr.mxu0 0.0
    %505 = vmatpush1.msra.mxu0 0.0
    %506 = vmatprep.subr.mxu0 0.0
    %507 = vmatpush1.msra.mxu0 0.0
    %508 = vmatprep.subr.mxu0 0.0
    %509 = vmatpush1.msra.mxu0 0.0
    %510 = vmatprep.subr.mxu0 0.0
    %511 = vmatpush1.msra.mxu0 0.0
    %512 = vmatprep.subr.mxu0 0.0
    %513 = vmatpush1.msra.mxu0 0.0
    %514 = vmatprep.subr.mxu0 0.0
    %515 = vmatpush1.msra.mxu0 0.0
    %516 = vmatprep.subr.mxu0 0.0
    %517 = vmatpush1.msra.mxu0 0.0
    %518 = vmatprep.subr.mxu0 0.0
    %519 = vmatpush1.msra.mxu0 0.0
    %520 = vmatprep.subr.mxu0 0.0
    %521 = vmatpush1.msra.mxu0 0.0
    %522 = vmatprep.subr.mxu0 0.0
    %523 = vmatpush1.msra.mxu0 0.0
    %524 = vmatprep.subr.mxu0 0.0
    %525 = vmatpush1.msra.mxu0 0.0
    %526 = vmatprep.subr.mxu0 0.0
    %527 = vmatpush1.msra.mxu0 0.0
    %528 = vmatprep.subr.mxu0 0.0
    %529 = vmatpush1.msra.mxu0 0.0
    %530 = vmatprep.subr.mxu0 0.0
    %531 = vmatpush1.msra.mxu0 0.0
    %532 = vmatprep.subr.mxu0 0.0
    %533 = vmatpush1.msra.mxu0 0.0
    %534 = vmatprep.subr.mxu0 0.0
    %535 = vmatpush1.msra.mxu0 0.0
    %536 = vmatprep.subr.mxu0 0.0
    %537 = vmatpush1.msra.mxu0 0.0
    %538 = vmatprep.subr.mxu0 0.0
    %539 = vmatpush1.msra.mxu0 0.0
    %540 = vmatprep.subr.mxu0 0.0
    %541 = vmatpush1.msra.mxu0 0.0
    %542 = vmatprep.subr.mxu0 0.0
    %543 = vmatpush1.msra.mxu0 0.0
    %544 = vmatprep.subr.mxu0 0.0
    %545 = vmatpush1.msra.mxu0 0.0
    %546 = vmatprep.subr.mxu0 0.0
    %547 = vmatpush1.msra.mxu0 0.0
    %548 = vmatprep.subr.mxu0 0.0
    %549 = vmatpush1.msra.mxu0 0.0
    %550 = vmatprep.mubr.f32.mxu0 0.0
    %551 = vmatmul.mubr.f32.gmra.mrb[0].mxu0 %v484
    %v552 = vpop.f32.mrb[0].mxu0
    %v553 = vadd.f32 %v51, %v552
    %v554 = vpop.f32.mrb[0].mxu0
    %555 = vdwg.mxu0
    %v556 = vmul.f32 %v553, 2.0
    %v557 = vsel %vm57, %v556, %v553
    %v558 = vxor.u32 %v557, 2147483648
    %v559 = vmul.f32 %v558, 1.442695
    %v560 = vpow.pop %v559
    %v561 = vadd.f32 %v560, 1.0
    %v562 = vrcp.pop %v561
    %v563 = vmul.f32 1.0, %v562
    %v564 = vmul.f32 %v563, 2.0
    %v565 = vsub.f32 %v564, 1.0
    %v566 = vsel %vm57, %v565, %v563
    %v567 = vmul.f32 %v566, %v471
    %569 = vrot.lane.b32.xlu0 %v566, 64
    %v570 = vpop.permute.xlu0 %569
    %v572 = vmul.f32 %v566, %v570
    %574 = vrot.lane.b32.xlu0 %v572, 32
    %v575 = vpop.permute.xlu0 %574
    %v577 = vadd.f32 %v567, %v575
    %v578 = vtanh.pop %v577
    %580 = vrot.lane.b32.xlu0 %v578, 64
    %v581 = vpop.permute.xlu0 %580
    %v583 = vmul.f32 %v566, %v581
    %585 = vrot.lane.b32.xlu0 %v583, 32
    %v586 = vpop.permute.xlu0 %585
    %s588 = scalar_lea.vmem [#allocation7], 16
    %589 = vst.msk [vmem:[%s588] sm:$0xf] %vm164, %v586
    %v590 = vsel %vm58, %v586, 0
    %592 = vmatprep.subr.mxu0 0.0
    %593 = vmatpush1.msra.mxu0 %v42
    %594 = vmatprep.subr.mxu0 0.0
    %595 = vmatpush1.msra.mxu0 %v43
    %596 = vmatprep.subr.mxu0 0.0
    %597 = vmatpush1.msra.mxu0 %v44
    %598 = vmatprep.subr.mxu0 0.0
    %599 = vmatpush1.msra.mxu0 %v45
    %600 = vmatprep.subr.mxu0 0.0
    %601 = vmatpush1.msra.mxu0 0.0
    %602 = vmatprep.subr.mxu0 0.0
    %603 = vmatpush1.msra.mxu0 0.0
    %604 = vmatprep.subr.mxu0 0.0
    %605 = vmatpush1.msra.mxu0 0.0
    %606 = vmatprep.subr.mxu0 0.0
    %607 = vmatpush1.msra.mxu0 0.0
    %608 = vmatprep.subr.mxu0 0.0
    %609 = vmatpush1.msra.mxu0 0.0
    %610 = vmatprep.subr.mxu0 0.0
    %611 = vmatpush1.msra.mxu0 0.0
    %612 = vmatprep.subr.mxu0 0.0
    %613 = vmatpush1.msra.mxu0 0.0
    %614 = vmatprep.subr.mxu0 0.0
    %615 = vmatpush1.msra.mxu0 0.0
    %616 = vmatprep.subr.mxu0 0.0
    %617 = vmatpush1.msra.mxu0 0.0
    %618 = vmatprep.subr.mxu0 0.0
    %619 = vmatpush1.msra.mxu0 0.0
    %620 = vmatprep.subr.mxu0 0.0
    %621 = vmatpush1.msra.mxu0 0.0
    %622 = vmatprep.subr.mxu0 0.0
    %623 = vmatpush1.msra.mxu0 0.0
    %624 = vmatprep.subr.mxu0 0.0
    %625 = vmatpush1.msra.mxu0 0.0
    %626 = vmatprep.subr.mxu0 0.0
    %627 = vmatpush1.msra.mxu0 0.0
    %628 = vmatprep.subr.mxu0 0.0
    %629 = vmatpush1.msra.mxu0 0.0
    %630 = vmatprep.subr.mxu0 0.0
    %631 = vmatpush1.msra.mxu0 0.0
    %632 = vmatprep.subr.mxu0 0.0
    %633 = vmatpush1.msra.mxu0 0.0
    %634 = vmatprep.subr.mxu0 0.0
    %635 = vmatpush1.msra.mxu0 0.0
    %636 = vmatprep.subr.mxu0 0.0
    %637 = vmatpush1.msra.mxu0 0.0
    %638 = vmatprep.subr.mxu0 0.0
    %639 = vmatpush1.msra.mxu0 0.0
    %640 = vmatprep.subr.mxu0 0.0
    %641 = vmatpush1.msra.mxu0 0.0
    %642 = vmatprep.subr.mxu0 0.0
    %643 = vmatpush1.msra.mxu0 0.0
    %644 = vmatprep.subr.mxu0 0.0
    %645 = vmatpush1.msra.mxu0 0.0
    %646 = vmatprep.subr.mxu0 0.0
    %647 = vmatpush1.msra.mxu0 0.0
    %648 = vmatprep.subr.mxu0 0.0
    %649 = vmatpush1.msra.mxu0 0.0
    %650 = vmatprep.subr.mxu0 0.0
    %651 = vmatpush1.msra.mxu0 0.0
    %652 = vmatprep.subr.mxu0 0.0
    %653 = vmatpush1.msra.mxu0 0.0
    %654 = vmatprep.subr.mxu0 0.0
    %655 = vmatpush1.msra.mxu0 0.0
    %656 = vmatprep.mubr.f32.mxu0 0.0
    %657 = vmatmul.mubr.f32.gmra.mrb[0].mxu0 %v590
    %v658 = vpop.f32.mrb[0].mxu0
    %v659 = vadd.f32 %v51, %v658
    %v660 = vpop.f32.mrb[0].mxu0
    %661 = vdwg.mxu0
    %v662 = vmul.f32 %v659, 2.0
    %v663 = vsel %vm57, %v662, %v659
    %v664 = vxor.u32 %v663, 2147483648
    %v665 = vmul.f32 %v664, 1.442695
    %v666 = vpow.pop %v665
    %v667 = vadd.f32 %v666, 1.0
    %v668 = vrcp.pop %v667
    %v669 = vmul.f32 1.0, %v668
    %v670 = vmul.f32 %v669, 2.0
    %v671 = vsub.f32 %v670, 1.0
    %v672 = vsel %vm57, %v671, %v669
    %v673 = vmul.f32 %v672, %v577
    %675 = vrot.lane.b32.xlu0 %v672, 64
    %v676 = vpop.permute.xlu0 %675
    %v678 = vmul.f32 %v672, %v676
    %680 = vrot.lane.b32.xlu0 %v678, 32
    %v681 = vpop.permute.xlu0 %680
    %v683 = vadd.f32 %v673, %v681
    %v684 = vtanh.pop %v683
    %686 = vrot.lane.b32.xlu0 %v684, 64
    %v687 = vpop.permute.xlu0 %686
    %v689 = vmul.f32 %v672, %v687
    %691 = vrot.lane.b32.xlu0 %v689, 32
    %v692 = vpop.permute.xlu0 %691
    %s694 = scalar_lea.vmem [#allocation7], 20
    %695 = vst.msk [vmem:[%s694] sm:$0xf] %vm164, %v692
    %v696 = vsel %vm58, %v692, 0
    %698 = vmatprep.subr.mxu0 0.0
    %699 = vmatpush1.msra.mxu0 %v42
    %700 = vmatprep.subr.mxu0 0.0
    %701 = vmatpush1.msra.mxu0 %v43
    %702 = vmatprep.subr.mxu0 0.0
    %703 = vmatpush1.msra.mxu0 %v44
    %704 = vmatprep.subr.mxu0 0.0
    %705 = vmatpush1.msra.mxu0 %v45
    %706 = vmatprep.subr.mxu0 0.0
    %707 = vmatpush1.msra.mxu0 0.0
    %708 = vmatprep.subr.mxu0 0.0
    %709 = vmatpush1.msra.mxu0 0.0
    %710 = vmatprep.subr.mxu0 0.0
    %711 = vmatpush1.msra.mxu0 0.0
    %712 = vmatprep.subr.mxu0 0.0
    %713 = vmatpush1.msra.mxu0 0.0
    %714 = vmatprep.subr.mxu0 0.0
    %715 = vmatpush1.msra.mxu0 0.0
    %716 = vmatprep.subr.mxu0 0.0
    %717 = vmatpush1.msra.mxu0 0.0
    %718 = vmatprep.subr.mxu0 0.0
    %719 = vmatpush1.msra.mxu0 0.0
    %720 = vmatprep.subr.mxu0 0.0
    %721 = vmatpush1.msra.mxu0 0.0
    %722 = vmatprep.subr.mxu0 0.0
    %723 = vmatpush1.msra.mxu0 0.0
    %724 = vmatprep.subr.mxu0 0.0
    %725 = vmatpush1.msra.mxu0 0.0
    %726 = vmatprep.subr.mxu0 0.0
    %727 = vmatpush1.msra.mxu0 0.0
    %728 = vmatprep.subr.mxu0 0.0
    %729 = vmatpush1.msra.mxu0 0.0
    %730 = vmatprep.subr.mxu0 0.0
    %731 = vmatpush1.msra.mxu0 0.0
    %732 = vmatprep.subr.mxu0 0.0
    %733 = vmatpush1.msra.mxu0 0.0
    %734 = vmatprep.subr.mxu0 0.0
    %735 = vmatpush1.msra.mxu0 0.0
    %736 = vmatprep.subr.mxu0 0.0
    %737 = vmatpush1.msra.mxu0 0.0
    %738 = vmatprep.subr.mxu0 0.0
    %739 = vmatpush1.msra.mxu0 0.0
    %740 = vmatprep.subr.mxu0 0.0
    %741 = vmatpush1.msra.mxu0 0.0
    %742 = vmatprep.subr.mxu0 0.0
    %743 = vmatpush1.msra.mxu0 0.0
    %744 = vmatprep.subr.mxu0 0.0
    %745 = vmatpush1.msra.mxu0 0.0
    %746 = vmatprep.subr.mxu0 0.0
    %747 = vmatpush1.msra.mxu0 0.0
    %748 = vmatprep.subr.mxu0 0.0
    %749 = vmatpush1.msra.mxu0 0.0
    %750 = vmatprep.subr.mxu0 0.0
    %751 = vmatpush1.msra.mxu0 0.0
    %752 = vmatprep.subr.mxu0 0.0
    %753 = vmatpush1.msra.mxu0 0.0
    %754 = vmatprep.subr.mxu0 0.0
    %755 = vmatpush1.msra.mxu0 0.0
    %756 = vmatprep.subr.mxu0 0.0
    %757 = vmatpush1.msra.mxu0 0.0
    %758 = vmatprep.subr.mxu0 0.0
    %759 = vmatpush1.msra.mxu0 0.0
    %760 = vmatprep.subr.mxu0 0.0
    %761 = vmatpush1.msra.mxu0 0.0
    %762 = vmatprep.mubr.f32.mxu0 0.0
    %763 = vmatmul.mubr.f32.gmra.mrb[0].mxu0 %v696
    %v764 = vpop.f32.mrb[0].mxu0
    %v765 = vadd.f32 %v51, %v764
    %v766 = vpop.f32.mrb[0].mxu0
    %767 = vdwg.mxu0
    %v768 = vmul.f32 %v765, 2.0
    %v769 = vsel %vm57, %v768, %v765
    %v770 = vxor.u32 %v769, 2147483648
    %v771 = vmul.f32 %v770, 1.442695
    %v772 = vpow.pop %v771
    %v773 = vadd.f32 %v772, 1.0
    %v774 = vrcp.pop %v773
    %v775 = vmul.f32 1.0, %v774
    %v776 = vmul.f32 %v775, 2.0
    %v777 = vsub.f32 %v776, 1.0
    %v778 = vsel %vm57, %v777, %v775
    %v779 = vmul.f32 %v778, %v683
    %781 = vrot.lane.b32.xlu0 %v778, 64
    %v782 = vpop.permute.xlu0 %781
    %v784 = vmul.f32 %v778, %v782
    %786 = vrot.lane.b32.xlu0 %v784, 32
    %v787 = vpop.permute.xlu0 %786
    %v789 = vadd.f32 %v779, %v787
    %v790 = vtanh.pop %v789
    %792 = vrot.lane.b32.xlu0 %v790, 64
    %v793 = vpop.permute.xlu0 %792
    %v795 = vmul.f32 %v778, %v793
    %797 = vrot.lane.b32.xlu0 %v795, 32
    %v798 = vpop.permute.xlu0 %797
    %s800 = scalar_lea.vmem [#allocation7], 24
    %801 = vst.msk [vmem:[%s800] sm:$0xf] %vm164, %v798
    %v802 = vsel %vm58, %v798, 0
    %804 = vmatprep.subr.mxu0 0.0
    %805 = vmatpush1.msra.mxu0 %v42
    %806 = vmatprep.subr.mxu0 0.0
    %807 = vmatpush1.msra.mxu0 %v43
    %808 = vmatprep.subr.mxu0 0.0
    %809 = vmatpush1.msra.mxu0 %v44
    %810 = vmatprep.subr.mxu0 0.0
    %811 = vmatpush1.msra.mxu0 %v45
    %812 = vmatprep.subr.mxu0 0.0
    %813 = vmatpush1.msra.mxu0 0.0
    %814 = vmatprep.subr.mxu0 0.0
    %815 = vmatpush1.msra.mxu0 0.0
    %816 = vmatprep.subr.mxu0 0.0
    %817 = vmatpush1.msra.mxu0 0.0
    %818 = vmatprep.subr.mxu0 0.0
    %819 = vmatpush1.msra.mxu0 0.0
    %820 = vmatprep.subr.mxu0 0.0
    %821 = vmatpush1.msra.mxu0 0.0
    %822 = vmatprep.subr.mxu0 0.0
    %823 = vmatpush1.msra.mxu0 0.0
    %824 = vmatprep.subr.mxu0 0.0
    %825 = vmatpush1.msra.mxu0 0.0
    %826 = vmatprep.subr.mxu0 0.0
    %827 = vmatpush1.msra.mxu0 0.0
    %828 = vmatprep.subr.mxu0 0.0
    %829 = vmatpush1.msra.mxu0 0.0
    %830 = vmatprep.subr.mxu0 0.0
    %831 = vmatpush1.msra.mxu0 0.0
    %832 = vmatprep.subr.mxu0 0.0
    %833 = vmatpush1.msra.mxu0 0.0
    %834 = vmatprep.subr.mxu0 0.0
    %835 = vmatpush1.msra.mxu0 0.0
    %836 = vmatprep.subr.mxu0 0.0
    %837 = vmatpush1.msra.mxu0 0.0
    %838 = vmatprep.subr.mxu0 0.0
    %839 = vmatpush1.msra.mxu0 0.0
    %840 = vmatprep.subr.mxu0 0.0
    %841 = vmatpush1.msra.mxu0 0.0
    %842 = vmatprep.subr.mxu0 0.0
    %843 = vmatpush1.msra.mxu0 0.0
    %844 = vmatprep.subr.mxu0 0.0
    %845 = vmatpush1.msra.mxu0 0.0
    %846 = vmatprep.subr.mxu0 0.0
    %847 = vmatpush1.msra.mxu0 0.0
    %848 = vmatprep.subr.mxu0 0.0
    %849 = vmatpush1.msra.mxu0 0.0
    %850 = vmatprep.subr.mxu0 0.0
    %851 = vmatpush1.msra.mxu0 0.0
    %852 = vmatprep.subr.mxu0 0.0
    %853 = vmatpush1.msra.mxu0 0.0
    %854 = vmatprep.subr.mxu0 0.0
    %855 = vmatpush1.msra.mxu0 0.0
    %856 = vmatprep.subr.mxu0 0.0
    %857 = vmatpush1.msra.mxu0 0.0
    %858 = vmatprep.subr.mxu0 0.0
    %859 = vmatpush1.msra.mxu0 0.0
    %860 = vmatprep.subr.mxu0 0.0
    %861 = vmatpush1.msra.mxu0 0.0
    %862 = vmatprep.subr.mxu0 0.0
    %863 = vmatpush1.msra.mxu0 0.0
    %864 = vmatprep.subr.mxu0 0.0
    %865 = vmatpush1.msra.mxu0 0.0
    %866 = vmatprep.subr.mxu0 0.0
    %867 = vmatpush1.msra.mxu0 0.0
    %868 = vmatprep.mubr.f32.mxu0 0.0
    %869 = vmatmul.mubr.f32.gmra.mrb[0].mxu0 %v802
    %v870 = vpop.f32.mrb[0].mxu0
    %v871 = vadd.f32 %v51, %v870
    %v872 = vpop.f32.mrb[0].mxu0
    %873 = vdwg.mxu0
    %v874 = vmul.f32 %v871, 2.0
    %v875 = vsel %vm57, %v874, %v871
    %v876 = vxor.u32 %v875, 2147483648
    %v877 = vmul.f32 %v876, 1.442695
    %v878 = vpow.pop %v877
    %v879 = vadd.f32 %v878, 1.0
    %v880 = vrcp.pop %v879
    %v881 = vmul.f32 1.0, %v880
    %v882 = vmul.f32 %v881, 2.0
    %v883 = vsub.f32 %v882, 1.0
    %v884 = vsel %vm57, %v883, %v881
    %v885 = vmul.f32 %v884, %v789
    %887 = vrot.lane.b32.xlu0 %v884, 64
    %v888 = vpop.permute.xlu0 %887
    %v890 = vmul.f32 %v884, %v888
    %892 = vrot.lane.b32.xlu0 %v890, 32
    %v893 = vpop.permute.xlu0 %892
    %v895 = vadd.f32 %v885, %v893
    %v896 = vtanh.pop %v895
    %898 = vrot.lane.b32.xlu0 %v896, 64
    %v899 = vpop.permute.xlu0 %898
    %v901 = vmul.f32 %v884, %v899
    %903 = vrot.lane.b32.xlu0 %v901, 32
    %v904 = vpop.permute.xlu0 %903
    %s906 = scalar_lea.vmem [#allocation7], 28
    %907 = vst.msk [vmem:[%s906] sm:$0xf] %vm164, %v904
    // Predicated region
    $region22: #{tpu_custom_call.1} parent=1 // pred_check
      _
    $region23: #{tpu_custom_call.1} parent=1 // pred_check_branch
      %909 = sbr.rel (0) target = $region25
    $region24: #{tpu_custom_call.1} parent=1 // pred_region
      %s911 = ssub.s32 512, 512
      %912 = vsyncadd [#allocation4], %s911
      %s913 = sshll.u32 [#allocation7], 4
      %s914 = int_to_ptr.vmem [resolvable:$true] %s913
      %919 = dma.vmem_to_hbm [thread:$0]  %s914, 512, %s3, [#allocation4], 64, 64, 4
    $region25: #{tpu_custom_call.1} parent=1 // pred_fallthru
      _
    // Predicated region
    $region26: #{tpu_custom_call.1} parent=1 // pred_check
      _
    $region27: #{tpu_custom_call.1} parent=1 // pred_check_branch
      %921 = sbr.rel (0) target = $region29
    $region28: #{tpu_custom_call.1} parent=1 // pred_region
      %922 = dma.done [#allocation4], 512
    $region29: #{tpu_custom_call.1} parent=1 // pred_fallthru
      _
    %923 = vsyncpa [#allocation3], 1
    %924 = vsyncpa [#allocation6], 1
    %925 = vsyncpa [#allocation4], 1

</llo_original>
